<compile_context>
chip_gen: v7x
topology: tpu7x:2x2x1
jax: 0.10.0
libtpu: 0.0.40
codegen_flags: <defaults>
</compile_context>

<pallas_src>
import functools
import math

import numpy as np

import jax
import jax.numpy as jnp
from jax.experimental import pallas as pl
from jax.experimental.pallas import tpu as pltpu

_LANE = 128


def _round_up(x: int, m: int) -> int:
    return ((x + m - 1) // m) * m


def _sublane(dtype) -> int:
    """Second-minor tile size for a dtype (8 for f32, 16 for bf16, 32 for u8)."""
    return max(8, 32 // jnp.dtype(dtype).itemsize)


def _interp_matrix(in_size: int, out_size: int) -> jnp.ndarray:
    """Dense (out_size, in_size) bilinear interpolation matrix matching
    torch.nn.functional.interpolate(mode='bilinear', align_corners=False)."""
    scale = in_size / out_size
    dst = jnp.arange(out_size, dtype=jnp.float32)
    src = (dst + 0.5) * scale - 0.5
    src = jnp.maximum(src, 0.0)               # PyTorch clamps negative src coords.
    x0 = jnp.floor(src).astype(jnp.int32)
    x0 = jnp.minimum(x0, in_size - 1)
    x1 = jnp.minimum(x0 + 1, in_size - 1)
    lam = src - x0.astype(jnp.float32)
    rows = jnp.arange(out_size)
    w = jnp.zeros((out_size, in_size), dtype=jnp.float32)
    w = w.at[rows, x0].add(1.0 - lam)
    w = w.at[rows, x1].add(lam)
    return w


def _resize_kernel(x_ref, a_ref, bt_ref, o_ref, *, rows_first, flatten, compute_dtype):
    # x_ref : (TB, H, W)             block of source images (source dtype; may be uint8)
    # a_ref : (new_h, H)             row-interp matrix, already in compute dtype
    # bt_ref: (W, new_w_pad)         col-interp matrix^T, zero-padded, compute dtype
    # o_ref : (TB, new_h, new_w_pad)
    a = a_ref[...]
    bt = bt_ref[...]
    tb, h, w = x_ref.shape
    new_h = a.shape[0]
    nwp = bt.shape[1]

    def load(idx):
        v = x_ref[...] if idx is None else x_ref[idx]
        if v.dtype != compute_dtype:
            if not jnp.issubdtype(v.dtype, jnp.floating):
                v = v.astype(jnp.float32)      # in-kernel uint8/int -> float cast
            v = v.astype(compute_dtype)
        return v

    if rows_first:
        # Stage 1 contracts H per image (shared LHS `a` streams; RHS differs anyway).
        if flatten:
            rows = [jnp.dot(a, load(b), preferred_element_type=jnp.float32)
                    .astype(compute_dtype) for b in range(tb)]
            # Stage 2: one big lane-dense matmul keeps B^T resident in the MXU.
            out = jnp.dot(jnp.concatenate(rows, axis=0), bt,
                          preferred_element_type=jnp.float32)          # (TB*new_h, Nwp)
            o_ref[...] = out.reshape(tb, new_h, nwp).astype(o_ref.dtype)
        else:
            for b in range(tb):                                         # fully unrolled
                t_b = jnp.dot(a, load(b), preferred_element_type=jnp.float32)
                out = jnp.dot(t_b.astype(compute_dtype), bt,
                              preferred_element_type=jnp.float32)
                o_ref[b] = out.astype(o_ref.dtype)
    else:
        # Stage 1 contracts W.
        if flatten:
            # One flattened (TB*H, W) @ (W, Nwp) matmul: huge M, B^T stays resident.
            xall = load(None)
            tmp = jnp.dot(xall.reshape(tb * h, w), bt,
                          preferred_element_type=jnp.float32)
            tmp = tmp.reshape(tb, h, nwp).astype(compute_dtype)
            for b in range(tb):
                out = jnp.dot(a, tmp[b], preferred_element_type=jnp.float32)
                o_ref[b] = out.astype(o_ref.dtype)
        else:
            for b in range(tb):
                t_b = jnp.dot(load(b), bt, preferred_element_type=jnp.float32)
                out = jnp.dot(a, t_b.astype(compute_dtype),
                              preferred_element_type=jnp.float32)
                o_ref[b] = out.astype(o_ref.dtype)


def _vmem_limit_bytes() -> int:
    try:
        phys = int(pltpu.get_tpu_info().vmem_capacity_bytes)
    except Exception:
        phys = 64 * 1024 * 1024        # conservative (v7x-sized VMEM)
    # ~96 MiB on v5e/v6e (128 MiB physical), ~48 MiB on v7x (64 MiB physical).
    return min(phys * 3 // 4, 100 * 1024 * 1024)


def short_side_scale(x: jnp.ndarray, size: int,
                     interpolation: str = "bilinear",
                     use_bf16: bool = True) -> jnp.ndarray:
    """x: (C, T, H, W) -> (C, T, new_h, new_w); short side scaled to `size`."""
    assert x.ndim == 4, "expected (C, T, H, W)"
    assert interpolation == "bilinear", "only bilinear is implemented"
    c, t, h, w = x.shape
    if w < h:
        new_h = int(math.floor((float(h) / w) * size))
        new_w = size
    else:
        new_h = size
        new_w = int(math.floor((float(w) / h) * size))

    # f32/bf16 frames and integer frames keep their dtype through the DMA
    # (integers are cast in-kernel). Other float dtypes fall back to f32.
    if x.dtype in (jnp.float32, jnp.bfloat16):
        x_in, out_dtype = x, x.dtype
    elif jnp.issubdtype(x.dtype, jnp.floating):
        # TODO(synk): f64/f16 inputs are computed and returned as f32.
        x_in, out_dtype = x.astype(jnp.float32), jnp.float32
    else:
        x_in, out_dtype = x, jnp.float32

    compute_dtype = jnp.bfloat16 if use_bf16 else jnp.float32

    # Interpolation matrices, pre-cast to the MXU operand dtype. B^T gets zero
    # columns so the output lane dim is a multiple of 128 (lane-dense stores);
    # the pad is exact and sliced off below only if it was added.
    new_w_pad = _round_up(new_w, _LANE)
    a = _interp_matrix(h, new_h).astype(compute_dtype)                 # (new_h, H)
    bt = _interp_matrix(w, new_w).T                                    # (W, new_w)
    if new_w_pad > new_w:
        bt = jnp.pad(bt, ((0, 0), (0, new_w_pad - new_w)))
    bt = bt.astype(compute_dtype)

    # Contraction order with fewer MACs.
    macs_rows_first = new_h * w * (h + new_w_pad)
    macs_cols_first = h * new_w_pad * (w + new_h)
    rows_first = macs_rows_first <= macs_cols_first
    macs = min(macs_rows_first, macs_cols_first)

    # Flatten the shared-RHS stage into one big matmul when the merged
    # second-minor dim is sublane-aligned for the compute dtype.
    packing = _sublane(compute_dtype)
    flatten = (new_h % packing == 0) if rows_first else (h % packing == 0)

    n = c * t
    x_flat = x_in.reshape(n, h, w)                # free reshape (leading dims)

    # --- TB (images per grid step) from a padded-footprint VMEM budget -------
    elt_in = jnp.dtype(x_flat.dtype).itemsize
    elt_out = jnp.dtype(out_dtype).itemsize
    cmp = jnp.dtype(compute_dtype).itemsize
    in_pad = _round_up(h, _sublane(x_flat.dtype)) * _round_up(w, _LANE)
    out_pad = _round_up(new_h, _sublane(out_dtype)) * new_w_pad
    mid_h, mid_w = (new_h, w) if rows_first else (h, new_w_pad)
    mid_pad = _round_up(mid_h, 8) * _round_up(mid_w, _LANE)
    per_img = (2 * in_pad * elt_in            # double-buffered input block
               + 2 * out_pad * elt_out        # double-buffered output block
               + in_pad * cmp                 # in-kernel cast copy of the input
               + mid_pad * (4 + cmp)          # f32 intermediate + compute-dtype copy
               + out_pad * 4)                 # f32 result before the output cast
    a_bytes = _round_up(new_h, _sublane(compute_dtype)) * _round_up(h, _LANE) * cmp
    bt_bytes = _round_up(w, _sublane(compute_dtype)) * new_w_pad * cmp
    fixed = 2 * (a_bytes + bt_bytes) + (2 << 20)

    vmem_limit = _vmem_limit_bytes()
    tb = max(1, (int(vmem_limit * 0.65) - fixed) // per_img)
    # Keep >= 16 grid steps (>= 8 per TensorCore on dual-TC parts) so the
    # BlockSpec pipeline hides HBM traffic; cap unrolling at 64 images/step.
    tb = int(min(tb, max(1, -(-n // 16)), 64))

    n_pad = _round_up(n, tb)
    if n_pad != n:
        x_flat = jnp.pad(x_flat, ((0, n_pad - n), (0, 0), (0, 0)))
    grid_len = n_pad // tb

    kernel = functools.partial(_resize_kernel, rows_first=rows_first,
                               flatten=flatten, compute_dtype=compute_dtype)

    cost = pl.CostEstimate(
        flops=int(2 * n_pad * macs),
        transcendentals=0,
        bytes_accessed=int(n_pad * (h * w * elt_in + new_h * new_w_pad * elt_out)
                           + cmp * (int(a.size) + int(bt.size))),
    )

    out_flat = pl.pallas_call(
        kernel,
        out_shape=jax.ShapeDtypeStruct((n_pad, new_h, new_w_pad), out_dtype),
        grid_spec=pltpu.PrefetchScalarGridSpec(
            num_scalar_prefetch=0,
            grid=(grid_len,),
            in_specs=[
                pl.BlockSpec((tb, h, w), lambda i: (i, 0, 0)),
                pl.BlockSpec((new_h, h), lambda i: (0, 0)),
                pl.BlockSpec((w, new_w_pad), lambda i: (0, 0)),
            ],
            out_specs=pl.BlockSpec((tb, new_h, new_w_pad), lambda i: (i, 0, 0)),
        ),
        compiler_params=pltpu.CompilerParams(
            dimension_semantics=("parallel",),
            vmem_limit_bytes=int(vmem_limit),
        ),
        cost_estimate=cost,
    )(x_flat, a, bt)

    out = out_flat
    if n_pad != n or new_w_pad != new_w:
        out = out[:n, :, :new_w]          # exact depad, only when padding was added
    return out.reshape(c, t, new_h, new_w)


class ShortSideScale:
    """JAX/Pallas port of pytorchvideo ShortSideScale (backend='pytorch')."""

    def __init__(self, size: int, interpolation: str = "bilinear",
                 backend: str = "pytorch", use_bf16: bool = True):
        assert backend == "pytorch", "only backend='pytorch' is implemented"
        # TODO(synk): backend='opencv' (different resize convention) not implemented.
        self._size = size
        self._interpolation = interpolation
        self._backend = backend
        self._use_bf16 = use_bf16

    def __call__(self, x: jnp.ndarray) -> jnp.ndarray:
        return short_side_scale(x, self._size, self._interpolation,
                                use_bf16=self._use_bf16)


def _host_reference(x, size):
    """float64 reference built from the same interpolation matrices."""
    c, t, h, w = x.shape
    if w < h:
        new_h, new_w = int(math.floor((float(h) / w) * size)), size
    else:
        new_h, new_w = size, int(math.floor((float(w) / h) * size))
    a = np.asarray(_interp_matrix(h, new_h), dtype=np.float64)        # (new_h, H)
    b = np.asarray(_interp_matrix(w, new_w), dtype=np.float64)        # (new_w, W)
    xf = np.asarray(x, dtype=np.float64).reshape(c * t, h, w)
    out = a[None] @ xf @ b.T[None]
    return out.reshape(c, t, new_h, new_w)


if __name__ == "__main__":
    key = jax.random.PRNGKey(0)
    k1, k2 = jax.random.split(key)

    # Test 1: landscape frames, default bf16 MXU path (rows contracted first,
    # per-image unrolled dots since new_h is not sublane-aligned for bf16).
    C, T, H, W = 4, 8, 16, 20
    x1 = jax.random.uniform(k1, (C, T, H, W), dtype=jnp.float32)
    y1 = jax.block_until_ready(ShortSideScale(size=8)(x1))
    assert y1.shape == (C, T, 8, 10), y1.shape   # w >= h: new_w = floor(20/16*8) = 10
    assert y1.dtype == jnp.float32
    np.testing.assert_allclose(np.asarray(y1, np.float64), _host_reference(x1, 8),
                               atol=2e-2, rtol=2e-2)

    # Test 2: portrait frames exercising the flattened (TB*H, W) @ B^T matmul.
    x2 = jax.random.uniform(k2, (1, 8, 512, 256), dtype=jnp.float32)
    y2 = jax.block_until_ready(ShortSideScale(size=128)(x2))
    assert y2.shape == (1, 8, 256, 128), y2.shape  # w < h: new_h = floor(512/256*128) = 256
    np.testing.assert_allclose(np.asarray(y2, np.float64), _host_reference(x2, 128),
                               atol=2e-2, rtol=2e-2)

    # Test 3: exact-parity f32 path (also exercises the concatenated flattened
    # second stage, since new_h is 8-aligned for f32).
    y3 = jax.block_until_ready(ShortSideScale(size=8, use_bf16=False)(x1))
    np.testing.assert_allclose(np.asarray(y3, np.float64), _host_reference(x1, 8),
                               atol=1e-4, rtol=1e-4)

    print("KERNEL_OK")
</pallas_src>

<mosaic_0001>
module attributes {stable_mosaic.version = 11 : i64} {
  func.func @_resize_kernel(%arg0: i32, %arg1: memref<2x16x20xf32, #tpu.memory_space<vmem>>, %arg2: memref<8x16xbf16, #tpu.memory_space<vmem>>, %arg3: memref<20x128xbf16, #tpu.memory_space<vmem>>, %arg4: memref<2x8x128xf32, #tpu.memory_space<vmem>>) attributes {dimension_semantics = [#tpu.dimension_semantics<parallel>], iteration_bounds = array<i64: 16>, scalar_prefetch = 0 : i64, scratch_operands = 0 : i64, tpu.core_type = #tpu.core_type<tc>, window_params = [{transform_indices = @transform_0, window_bounds = array<i64: 2, 16, 20>}, {pipeline_mode = #tpu.pipeline_mode<synchronous>, transform_indices = @transform_1, window_bounds = array<i64: 8, 16>}, {pipeline_mode = #tpu.pipeline_mode<synchronous>, transform_indices = @transform_2, window_bounds = array<i64: 20, 128>}, {transform_indices = @transform_3, window_bounds = array<i64: 2, 8, 128>}]} {
    %c0 = arith.constant 0 : index
    %c0_0 = arith.constant 0 : index
    %0 = vector.load %arg2[%c0, %c0_0] : memref<8x16xbf16, #tpu.memory_space<vmem>>, vector<8x16xbf16>
    %c0_1 = arith.constant 0 : index
    %c0_2 = arith.constant 0 : index
    %1 = vector.load %arg3[%c0_1, %c0_2] : memref<20x128xbf16, #tpu.memory_space<vmem>>, vector<20x128xbf16>
    %c0_3 = arith.constant 0 : index
    %c0_4 = arith.constant 0 : index
    %c0_5 = arith.constant 0 : index
    %2 = vector.load %arg1[%c0_3, %c0_4, %c0_5] : memref<2x16x20xf32, #tpu.memory_space<vmem>>, vector<1x16x20xf32>
    %3 = vector.shape_cast %2 : vector<1x16x20xf32> to vector<16x20xf32>
    %4 = arith.truncf %3 : vector<16x20xf32> to vector<16x20xbf16>
    %cst = arith.constant dense<0.000000e+00> : vector<8x20xf32>
    %5 = tpu.matmul %0, %4, %cst {dimension_numbers = #tpu.dot_dimension_numbers<[1], [0], [0], [1], [0, 0, 1, 1], [], []>} : vector<8x16xbf16>, vector<16x20xbf16>, vector<8x20xf32> -> vector<8x20xf32>
    %6 = arith.truncf %5 : vector<8x20xf32> to vector<8x20xbf16>
    %cst_6 = arith.constant dense<0.000000e+00> : vector<8x128xf32>
    %7 = tpu.matmul %6, %1, %cst_6 {dimension_numbers = #tpu.dot_dimension_numbers<[1], [0], [0], [1], [0, 0, 1, 1], [], []>} : vector<8x20xbf16>, vector<20x128xbf16>, vector<8x128xf32> -> vector<8x128xf32>
    %c0_7 = arith.constant 0 : index
    %c0_8 = arith.constant 0 : index
    %c0_9 = arith.constant 0 : index
    %8 = vector.load %arg4[%c0_7, %c0_8, %c0_9] : memref<2x8x128xf32, #tpu.memory_space<vmem>>, vector<1x8x128xf32>
    %9 = vector.shape_cast %8 : vector<1x8x128xf32> to vector<8x128xf32>
    %10 = vector.shape_cast %7 : vector<8x128xf32> to vector<1x8x128xf32>
    tpu.vector_store %arg4[%c0_7, %c0_8, %c0_9], %10 {strides = array<i32>} : memref<2x8x128xf32, #tpu.memory_space<vmem>>, vector<1x8x128xf32>,
    %c1 = arith.constant 1 : index
    %c0_10 = arith.constant 0 : index
    %c0_11 = arith.constant 0 : index
    %11 = vector.load %arg1[%c1, %c0_10, %c0_11] : memref<2x16x20xf32, #tpu.memory_space<vmem>>, vector<1x16x20xf32>
    %12 = vector.shape_cast %11 : vector<1x16x20xf32> to vector<16x20xf32>
    %13 = arith.truncf %12 : vector<16x20xf32> to vector<16x20xbf16>
    %cst_12 = arith.constant dense<0.000000e+00> : vector<8x20xf32>
    %14 = tpu.matmul %0, %13, %cst_12 {dimension_numbers = #tpu.dot_dimension_numbers<[1], [0], [0], [1], [0, 0, 1, 1], [], []>} : vector<8x16xbf16>, vector<16x20xbf16>, vector<8x20xf32> -> vector<8x20xf32>
    %15 = arith.truncf %14 : vector<8x20xf32> to vector<8x20xbf16>
    %cst_13 = arith.constant dense<0.000000e+00> : vector<8x128xf32>
    %16 = tpu.matmul %15, %1, %cst_13 {dimension_numbers = #tpu.dot_dimension_numbers<[1], [0], [0], [1], [0, 0, 1, 1], [], []>} : vector<8x20xbf16>, vector<20x128xbf16>, vector<8x128xf32> -> vector<8x128xf32>
    %c1_14 = arith.constant 1 : index
    %c0_15 = arith.constant 0 : index
    %c0_16 = arith.constant 0 : index
    %17 = vector.load %arg4[%c1_14, %c0_15, %c0_16] : memref<2x8x128xf32, #tpu.memory_space<vmem>>, vector<1x8x128xf32>
    %18 = vector.shape_cast %17 : vector<1x8x128xf32> to vector<8x128xf32>
    %19 = vector.shape_cast %16 : vector<8x128xf32> to vector<1x8x128xf32>
    tpu.vector_store %arg4[%c1_14, %c0_15, %c0_16], %19 {strides = array<i32>} : memref<2x8x128xf32, #tpu.memory_space<vmem>>, vector<1x8x128xf32>,
    return
  }
  func.func @transform_0(%arg0: i32) -> (i32, i32, i32) {
    %c0_i32 = arith.constant 0 : i32
    %c0_i32_0 = arith.constant 0 : i32
    %c0_i32_1 = arith.constant 0 : i32
    return %arg0, %c0_i32, %c0_i32_0 : i32, i32, i32
  }
  func.func @transform_1(%arg0: i32) -> (i32, i32) {
    %c0_i32 = arith.constant 0 : i32
    %c0_i32_0 = arith.constant 0 : i32
    %c0_i32_1 = arith.constant 0 : i32
    return %c0_i32, %c0_i32_0 : i32, i32
  }
  func.func @transform_2(%arg0: i32) -> (i32, i32) {
    %c0_i32 = arith.constant 0 : i32
    %c0_i32_0 = arith.constant 0 : i32
    %c0_i32_1 = arith.constant 0 : i32
    return %c0_i32, %c0_i32_0 : i32, i32
  }
  func.func @transform_3(%arg0: i32) -> (i32, i32, i32) {
    %c0_i32 = arith.constant 0 : i32
    %c0_i32_0 = arith.constant 0 : i32
    %c0_i32_1 = arith.constant 0 : i32
    return %arg0, %c0_i32, %c0_i32_0 : i32, i32, i32
  }
}

</mosaic_0001>

<llo_original>
// kernel: tpu_custom_call.1
$region0: #{tpu_custom_call.1}
  #allocation0 [shape = 'u32[]', space=smem, size = 0x4, offset = 0x4, fixed_abs, tag = 'smem constant byte address 0x4 - core index']
  #allocation1 [shape = 'u32[144,128]{1,0:T(1,128)}', space=vmem, size = 0x12000, scoped, tag = 'internal scratch']
  %s0 = inlined_call_operand.vmem [shape: f32[32,16,20], index: 0, kind: input, shape index: {}]
  %s1 = inlined_call_operand.vmem [shape: bf16[8,16], index: 1, kind: input, shape index: {}]
  %s2 = inlined_call_operand.vmem [shape: bf16[20,128], index: 2, kind: input, shape index: {}]
  %s3 = inlined_call_operand.hbm [shape: f32[32,8,128], index: 3, kind: output, shape index: {}]
  %s4 = sld [smem:[#allocation0]]
  $region45: #{tpu_custom_call.1} parent=0
    _
  %s6 = ssub.s32 1, %s4
  %s7 = scalar_select 0, %s6, %s4
  $region1: #{tpu_custom_call.1} parent=0
    #allocation2 [shape = 'u8[16384]{0}', space=vmem, size = 0x4000, scoped, tag = 'output window, operand 0']
    #allocation3 [shape = 's32[2]{0}', space=sflag, size = 0x8, scoped, tag = 'scoped memory for tpu_custom_call.1']
    %8 = vsyncpa [#allocation3], 0
    %s9 = scalar_lea.sflag [#allocation3], 1
    %10 = vsyncpa %s9, 0
    loop: start=0, step=1, limit=18
    $region2: #{tpu_custom_call.1} parent=1 // loop_pre_header
      _
    $region3: #{tpu_custom_call.1} parent=1 // loop_header
      %s12 = sphi 0, %s16
      %p13 = scmp.ge.s32.totalorder %s12, 18
      %s22 = sphi 0, %s24
      %s25 = sphi 0, %s22
      %s26 = sphi 0, %s25
      %s42 = sphi 0, %s26
      %s46 = sphi 0, %s46
      %s48 = sphi 0, %s46
      %s49 = sphi 0, %s48
      %s63 = sphi 0, %s49
      %s67 = sphi 0, %s67
      %s69 = sphi 0, %s67
      %s70 = sphi 0, %s69
      %s84 = sphi 0, %s70
      %s90 = sphi 0, %s92
      %s93 = sphi 0, %s90
      %s94 = sphi 0, %s93
      %s110 = sphi 0, %s94
    $region4: #{tpu_custom_call.1} parent=1 // loop_header_branch
      %15 = sbr.rel (%p13) target = $region8
    $region5: #{tpu_custom_call.1} parent=1 // loop_body
      %s17 = ssub.s32 %s12, 1
      %s18 = ssub.s32 %s12, 2
      %s19 = sadd.s32 %s12, 1
      %s20 = ssub.s32 %s12, %s19
      %p21 = scmp.eq.s32.totalorder %s20, 0
      %s23 = sadd.s32 %s22, 1
      %s24 = scalar_select %p21, %s22, %s23
      %p27 = pneg %p21
      %p28 = scmp.eq.s32.totalorder %s12, 15
      %p29 = por %p27, %p28
      %p30 = scmp.ne.s32.totalorder %s22, %s25
      %p31 = scmp.eq.s32.totalorder %s12, 0
      %p32 = por %p30, %p31
      %p33 = scmp.ne.s32.totalorder %s22, %s25
      %p34 = scmp.eq.s32.totalorder %s17, 15
      %p35 = por %p33, %p34
      %p36 = scmp.ne.s32.totalorder %s25, %s26
      %p37 = scmp.eq.s32.totalorder %s17, 0
      %p38 = por %p36, %p37
      %p39 = scmp.ne.s32.totalorder %s25, %s26
      %p40 = scmp.eq.s32.totalorder %s18, 15
      %p41 = por %p39, %p40
      %p43 = scmp.ne.s32.totalorder %s26, %s42
      %p44 = scmp.eq.s32.totalorder %s18, 0
      %p45 = por %p43, %p44
      %s47 = sadd.s32 %s46, 1
      %p50 = scmp.eq.s32.totalorder %s12, 15
      %p51 = scmp.ne.s32.totalorder %s46, %s48
      %p52 = scmp.eq.s32.totalorder %s12, 0
      %p53 = por %p51, %p52
      %p54 = scmp.ne.s32.totalorder %s46, %s48
      %p55 = scmp.eq.s32.totalorder %s17, 15
      %p56 = por %p54, %p55
      %p57 = scmp.ne.s32.totalorder %s48, %s49
      %p58 = scmp.eq.s32.totalorder %s17, 0
      %p59 = por %p57, %p58
      %p60 = scmp.ne.s32.totalorder %s48, %s49
      %p61 = scmp.eq.s32.totalorder %s18, 15
      %p62 = por %p60, %p61
      %p64 = scmp.ne.s32.totalorder %s49, %s63
      %p65 = scmp.eq.s32.totalorder %s18, 0
      %p66 = por %p64, %p65
      %s68 = sadd.s32 %s67, 1
      %p71 = scmp.eq.s32.totalorder %s12, 15
      %p72 = scmp.ne.s32.totalorder %s67, %s69
      %p73 = scmp.eq.s32.totalorder %s12, 0
      %p74 = por %p72, %p73
      %p75 = scmp.ne.s32.totalorder %s67, %s69
      %p76 = scmp.eq.s32.totalorder %s17, 15
      %p77 = por %p75, %p76
      %p78 = scmp.ne.s32.totalorder %s69, %s70
      %p79 = scmp.eq.s32.totalorder %s17, 0
      %p80 = por %p78, %p79
      %p81 = scmp.ne.s32.totalorder %s69, %s70
      %p82 = scmp.eq.s32.totalorder %s18, 15
      %p83 = por %p81, %p82
      %p85 = scmp.ne.s32.totalorder %s70, %s84
      %p86 = scmp.eq.s32.totalorder %s18, 0
      %p87 = por %p85, %p86
      %s88 = ssub.s32 %s12, %s19
      %p89 = scmp.eq.s32.totalorder %s88, 0
      %s91 = sadd.s32 %s90, 1
      %s92 = scalar_select %p89, %s90, %s91
      %p95 = pneg %p89
      %p96 = scmp.eq.s32.totalorder %s12, 15
      %p97 = por %p95, %p96
      %p98 = scmp.ne.s32.totalorder %s90, %s93
      %p99 = scmp.eq.s32.totalorder %s12, 0
      %p100 = por %p98, %p99
      %p101 = scmp.ne.s32.totalorder %s90, %s93
      %p102 = scmp.eq.s32.totalorder %s17, 15
      %p103 = por %p101, %p102
      %p104 = scmp.ne.s32.totalorder %s93, %s94
      %p105 = scmp.eq.s32.totalorder %s17, 0
      %p106 = por %p104, %p105
      %p107 = scmp.ne.s32.totalorder %s93, %s94
      %p108 = scmp.eq.s32.totalorder %s18, 15
      %p109 = por %p107, %p108
      %p111 = scmp.ne.s32.totalorder %s94, %s110
      %p112 = scmp.eq.s32.totalorder %s18, 0
      %p113 = por %p111, %p112
      %p114 = scmp.le.s32.totalorder 1, %s12
      %p115 = scmp.lt.s32.totalorder %s12, 17
      %p116 = pnand %p114, %p115
      %p117 = pneg %p116
      // Predicated region
      $region9: #{tpu_custom_call.1} parent=5 // pred_check
        _
      $region10: #{tpu_custom_call.1} parent=5 // pred_check_branch
        %119 = sbr.rel (%p116) target = $region12
      $region11: #{tpu_custom_call.1} parent=5 // pred_region
        %s120 = ssub.s32 %s12, 1
        // Predicated region
        $region13: #{tpu_custom_call.1} parent=11 // pred_check
          %p121 = pneg %p59
        $region14: #{tpu_custom_call.1} parent=11 // pred_check_branch
          %123 = sbr.rel (%p121) target = $region16
        $region15: #{tpu_custom_call.1} parent=11 // pred_region
          _
        $region16: #{tpu_custom_call.1} parent=11 // pred_fallthru
          _
        // Predicated region
        $region17: #{tpu_custom_call.1} parent=11 // pred_check
          %p124 = pneg %p80
        $region18: #{tpu_custom_call.1} parent=11 // pred_check_branch
          %126 = sbr.rel (%p124) target = $region20
        $region19: #{tpu_custom_call.1} parent=11 // pred_region
          _
        $region20: #{tpu_custom_call.1} parent=11 // pred_fallthru
          _
      $region12: #{tpu_custom_call.1} parent=5 // pred_fallthru
        _
      %p127 = scmp.lt.s32.totalorder %s12, 16
      // Predicated region
      $region21: #{tpu_custom_call.1} parent=5 // pred_check
        %p128 = pneg %p127
      $region22: #{tpu_custom_call.1} parent=5 // pred_check_branch
        %130 = sbr.rel (%p128) target = $region24
      $region23: #{tpu_custom_call.1} parent=5 // pred_region
        // Predicated region
        $region25: #{tpu_custom_call.1} parent=23 // pred_check
          %p131 = pneg %p32
        $region26: #{tpu_custom_call.1} parent=23 // pred_check_branch
          %133 = sbr.rel (%p131) target = $region28
        $region27: #{tpu_custom_call.1} parent=23 // pred_region
          %s134 = smul.u32 2, %s12
          %p135 = scmp.lt.s32.totalorder %s134, 31
          %s136 = scalar_select %p135, %s134, 31
          %s137 = smul.addr %s136, 2
          %s138 = smul.addr %s137, 8
          %s139 = scalar_lea.vmem %s0, %s138
          %s140 = smul.u32 2, %s12
        $region28: #{tpu_custom_call.1} parent=23 // pred_fallthru
          _
      $region24: #{tpu_custom_call.1} parent=5 // pred_fallthru
        _
      %p141 = scmp.le.s32.totalorder 1, %s12
      %p142 = scmp.lt.s32.totalorder %s12, 17
      %p143 = pnand %p141, %p142
      %p144 = pneg %p143
      // Predicated region
      $region29: #{tpu_custom_call.1} parent=5 // pred_check
        _
      $region30: #{tpu_custom_call.1} parent=5 // pred_check_branch
        %146 = sbr.rel (%p143) target = $region32
      $region31: #{tpu_custom_call.1} parent=5 // pred_region
        %s147 = ssub.s32 %s12, 1
        %s148 = smul.u32 2, %s17
        %p149 = scmp.lt.s32.totalorder %s148, 31
        %s150 = scalar_select %p149, %s148, 31
        %s151 = smul.addr %s150, 2
        %s152 = smul.addr %s151, 8
        %s153 = scalar_lea.vmem %s0, %s152
        %p154 = pneg %p38
        %p155 = pneg %p35
        %p156 = pneg %p59
        %p157 = pneg %p56
        %p158 = pneg %p80
        %p159 = pneg %p77
        %p160 = pneg %p106
        %p161 = pneg %p103
        %s162 = sand.u32 %s93, 1
        %s163 = scalar_lea.sflag [#allocation3], %s162
        %s164 = sand.u32 %s93, 1
        %s165 = smul.addr %s164, 16
        %s166 = scalar_lea.vmem [#allocation2], %s165
        %s167 = smul.u32 2, %s17
        %p168 = scmp.lt.s32.totalorder %s167, 31
        %s169 = scalar_select %p168, %s167, 31
        %s170 = smul.addr %s169, 2
        %s171 = smul.addr %s170, 8
        %s172 = scalar_lea.vmem %s0, %s171
        %s173 = smul.u32 2, %s17
        %s174 = smul.u32 2, %s17
        %v176 = vld [vmem:[%s1] sm:$0xf]
        %v177 = vld [vmem:[%s2] sm:$0xf]
        %v178 = vld [vmem:[%s2 + $0x4] sm:$0xf]
        %v179 = vld [vmem:[%s2 + $0x8] sm:$0x3]
        %v180 = vld [vmem:[%s172] sm:$0xff]
        %v181 = vld [vmem:[%s172 + $0x8] sm:$0xff]
        %v182 = vpack.c.bf16 %v181, %v180
        %vm183 = vcmask 130048
        %v185 = vsel %vm183, %v176, 0
        %187 = vmatprep.subr.bf16.mxu0 0
        %188 = vmatpush1.bf16.msra.mxu0 %v182
        %189 = vmatprep.subr.bf16.mxu0 0
        %190 = vmatpush1.bf16.msra.mxu0 0
        %191 = vmatprep.subr.bf16.mxu0 0
        %192 = vmatpush1.bf16.msra.mxu0 0
        %193 = vmatprep.subr.bf16.mxu0 0
        %194 = vmatpush1.bf16.msra.mxu0 0
        %195 = vmatprep.subr.bf16.mxu0 0
        %196 = vmatpush1.bf16.msra.mxu0 0
        %197 = vmatprep.subr.bf16.mxu0 0
        %198 = vmatpush1.bf16.msra.mxu0 0
        %199 = vmatprep.subr.bf16.mxu0 0
        %200 = vmatpush1.bf16.msra.mxu0 0
        %201 = vmatprep.subr.bf16.mxu0 0
        %202 = vmatpush1.bf16.msra.mxu0 0
        %203 = vmatprep.subr.bf16.mxu0 0
        %204 = vmatpush1.bf16.msra.mxu0 0
        %205 = vmatprep.subr.bf16.mxu0 0
        %206 = vmatpush1.bf16.msra.mxu0 0
        %207 = vmatprep.subr.bf16.mxu0 0
        %208 = vmatpush1.bf16.msra.mxu0 0
        %209 = vmatprep.subr.bf16.mxu0 0
        %210 = vmatpush1.bf16.msra.mxu0 0
        %211 = vmatprep.subr.bf16.mxu0 0
        %212 = vmatpush1.bf16.msra.mxu0 0
        %213 = vmatprep.subr.bf16.mxu0 0
        %214 = vmatpush1.bf16.msra.mxu0 0
        %215 = vmatprep.subr.bf16.mxu0 0
        %216 = vmatpush1.bf16.msra.mxu0 0
        %217 = vmatprep.subr.bf16.mxu0 0
        %218 = vmatpush1.bf16.msra.mxu0 0
        %219 = vmatprep.mubr.bf16.mxu0 0
        %220 = vmatmul.mubr.bf16.gmra.mrb[0].mxu0 %v185
        %v221 = vpop.f32.mrb[0].mxu0
        %v222 = vadd.f32 0.0, %v221
        %v223 = vpop.f32.mrb[0].mxu0
        %v224 = vpop.f32.mrb[0].mxu0
        %v225 = vpop.f32.mrb[0].mxu0
        %226 = vdwg.mxu0
        %v227 = vpack.c.bf16 %v222, %v222
        %v231 = vunpack.c.l.b16 %v177
        %v232 = vunpack.c.l.b16 %v178
        %v233 = vunpack.c.l.b16 %v179
        %v234 = vpack.c.b16 %v232, %v231
        %v235 = vpack.c.b16 %v233, %v233
        %vm237 = vcmask 162816
        %v239 = vsel %vm237, %v227, 0
        %vm241 = vcmask 1041408
        %v243 = vsel %vm241, %v235, 0
        %245 = vmatprep.subr.bf16.mxu0 0
        %246 = vmatpush1.bf16.msra.mxu0 %v234
        %247 = vmatprep.subr.bf16.mxu0 0
        %248 = vmatpush1.bf16.msra.mxu0 %v243
        %249 = vmatprep.subr.bf16.mxu0 0
        %250 = vmatpush1.bf16.msra.mxu0 0
        %251 = vmatprep.subr.bf16.mxu0 0
        %252 = vmatpush1.bf16.msra.mxu0 0
        %253 = vmatprep.subr.bf16.mxu0 0
        %254 = vmatpush1.bf16.msra.mxu0 0
        %255 = vmatprep.subr.bf16.mxu0 0
        %256 = vmatpush1.bf16.msra.mxu0 0
        %257 = vmatprep.subr.bf16.mxu0 0
        %258 = vmatpush1.bf16.msra.mxu0 0
        %259 = vmatprep.subr.bf16.mxu0 0
        %260 = vmatpush1.bf16.msra.mxu0 0
        %261 = vmatprep.subr.bf16.mxu0 0
        %262 = vmatpush1.bf16.msra.mxu0 0
        %263 = vmatprep.subr.bf16.mxu0 0
        %264 = vmatpush1.bf16.msra.mxu0 0
        %265 = vmatprep.subr.bf16.mxu0 0
        %266 = vmatpush1.bf16.msra.mxu0 0
        %267 = vmatprep.subr.bf16.mxu0 0
        %268 = vmatpush1.bf16.msra.mxu0 0
        %269 = vmatprep.subr.bf16.mxu0 0
        %270 = vmatpush1.bf16.msra.mxu0 0
        %271 = vmatprep.subr.bf16.mxu0 0
        %272 = vmatpush1.bf16.msra.mxu0 0
        %273 = vmatprep.subr.bf16.mxu0 0
        %274 = vmatpush1.bf16.msra.mxu0 0
        %275 = vmatprep.subr.bf16.mxu0 0
        %276 = vmatpush1.bf16.msra.mxu0 0
        %277 = vmatprep.mubr.bf16.mxu0 0
        %278 = vmatmul.mubr.bf16.gmra.mrb[0].mxu0 %v239
        %v279 = vpop.f32.mrb[0].mxu0
        %v280 = vadd.f32 0.0, %v279
        %v281 = vpop.f32.mrb[0].mxu0
        %v282 = vpop.f32.mrb[0].mxu0
        %v283 = vpop.f32.mrb[0].mxu0
        %284 = vdwg.mxu0
        %285 = vst [vmem:[%s166] sm:$0xff] %v280
        %s286 = scalar_lea.vmem %s172, 16
        %v287 = vld [vmem:[%s286] sm:$0xff]
        %v288 = vld [vmem:[%s286 + $0x8] sm:$0xff]
        %v289 = vpack.c.bf16 %v288, %v287
        %290 = vmatprep.subr.bf16.mxu0 0
        %291 = vmatpush1.bf16.msra.mxu0 %v289
        %292 = vmatprep.subr.bf16.mxu0 0
        %293 = vmatpush1.bf16.msra.mxu0 0
        %294 = vmatprep.subr.bf16.mxu0 0
        %295 = vmatpush1.bf16.msra.mxu0 0
        %296 = vmatprep.subr.bf16.mxu0 0
        %297 = vmatpush1.bf16.msra.mxu0 0
        %298 = vmatprep.subr.bf16.mxu0 0
        %299 = vmatpush1.bf16.msra.mxu0 0
        %300 = vmatprep.subr.bf16.mxu0 0
        %301 = vmatpush1.bf16.msra.mxu0 0
        %302 = vmatprep.subr.bf16.mxu0 0
        %303 = vmatpush1.bf16.msra.mxu0 0
        %304 = vmatprep.subr.bf16.mxu0 0
        %305 = vmatpush1.bf16.msra.mxu0 0
        %306 = vmatprep.subr.bf16.mxu0 0
        %307 = vmatpush1.bf16.msra.mxu0 0
        %308 = vmatprep.subr.bf16.mxu0 0
        %309 = vmatpush1.bf16.msra.mxu0 0
        %310 = vmatprep.subr.bf16.mxu0 0
        %311 = vmatpush1.bf16.msra.mxu0 0
        %312 = vmatprep.subr.bf16.mxu0 0
        %313 = vmatpush1.bf16.msra.mxu0 0
        %314 = vmatprep.subr.bf16.mxu0 0
        %315 = vmatpush1.bf16.msra.mxu0 0
        %316 = vmatprep.subr.bf16.mxu0 0
        %317 = vmatpush1.bf16.msra.mxu0 0
        %318 = vmatprep.subr.bf16.mxu0 0
        %319 = vmatpush1.bf16.msra.mxu0 0
        %320 = vmatprep.subr.bf16.mxu0 0
        %321 = vmatpush1.bf16.msra.mxu0 0
        %322 = vmatprep.mubr.bf16.mxu0 0
        %323 = vmatmul.mubr.bf16.gmra.mrb[0].mxu0 %v185
        %v324 = vpop.f32.mrb[0].mxu0
        %v325 = vadd.f32 0.0, %v324
        %v326 = vpop.f32.mrb[0].mxu0
        %v327 = vpop.f32.mrb[0].mxu0
        %v328 = vpop.f32.mrb[0].mxu0
        %329 = vdwg.mxu0
        %v330 = vpack.c.bf16 %v325, %v325
        %v332 = vsel %vm237, %v330, 0
        %334 = vmatprep.subr.bf16.mxu0 0
        %335 = vmatpush1.bf16.msra.mxu0 %v234
        %336 = vmatprep.subr.bf16.mxu0 0
        %337 = vmatpush1.bf16.msra.mxu0 %v243
        %338 = vmatprep.subr.bf16.mxu0 0
        %339 = vmatpush1.bf16.msra.mxu0 0
        %340 = vmatprep.subr.bf16.mxu0 0
        %341 = vmatpush1.bf16.msra.mxu0 0
        %342 = vmatprep.subr.bf16.mxu0 0
        %343 = vmatpush1.bf16.msra.mxu0 0
        %344 = vmatprep.subr.bf16.mxu0 0
        %345 = vmatpush1.bf16.msra.mxu0 0
        %346 = vmatprep.subr.bf16.mxu0 0
        %347 = vmatpush1.bf16.msra.mxu0 0
        %348 = vmatprep.subr.bf16.mxu0 0
        %349 = vmatpush1.bf16.msra.mxu0 0
        %350 = vmatprep.subr.bf16.mxu0 0
        %351 = vmatpush1.bf16.msra.mxu0 0
        %352 = vmatprep.subr.bf16.mxu0 0
        %353 = vmatpush1.bf16.msra.mxu0 0
        %354 = vmatprep.subr.bf16.mxu0 0
        %355 = vmatpush1.bf16.msra.mxu0 0
        %356 = vmatprep.subr.bf16.mxu0 0
        %357 = vmatpush1.bf16.msra.mxu0 0
        %358 = vmatprep.subr.bf16.mxu0 0
        %359 = vmatpush1.bf16.msra.mxu0 0
        %360 = vmatprep.subr.bf16.mxu0 0
        %361 = vmatpush1.bf16.msra.mxu0 0
        %362 = vmatprep.subr.bf16.mxu0 0
        %363 = vmatpush1.bf16.msra.mxu0 0
        %364 = vmatprep.subr.bf16.mxu0 0
        %365 = vmatpush1.bf16.msra.mxu0 0
        %366 = vmatprep.mubr.bf16.mxu0 0
        %367 = vmatmul.mubr.bf16.gmra.mrb[0].mxu0 %v332
        %v368 = vpop.f32.mrb[0].mxu0
        %v369 = vadd.f32 0.0, %v368
        %v370 = vpop.f32.mrb[0].mxu0
        %v371 = vpop.f32.mrb[0].mxu0
        %v372 = vpop.f32.mrb[0].mxu0
        %373 = vdwg.mxu0
        %s374 = scalar_lea.vmem %s166, 8 [#allocation2]
        %375 = vst [vmem:[%s374] sm:$0xff] %v369
        %s376 = sand.u32 %s93, 1
        %s377 = scalar_lea.sflag [#allocation3], %s376
        %s378 = sand.u32 %s93, 1
        %s379 = smul.addr %s378, 16
        %s380 = scalar_lea.vmem [#allocation2], %s379
        // Predicated region
        $region33: #{tpu_custom_call.1} parent=31 // pred_check
          %p381 = pneg %p103
        $region34: #{tpu_custom_call.1} parent=31 // pred_check_branch
          %383 = sbr.rel (%p381) target = $region36
        $region35: #{tpu_custom_call.1} parent=31 // pred_region
          %s384 = smul.u32 2, %s17
          %s386 = ssub.s32 256, 256
          %387 = vsyncadd %s377, %s386
          %s388 = smul.addr %s384, 128
          %s389 = scalar_lea.hbm %s3, %s388
          %s390 = sshll.u32 %s380, 4
          %s391 = int_to_ptr.vmem [resolvable:$true] %s390
          %396 = dma.vmem_to_hbm [thread:$0]  %s391, 256, %s389, %s377, 128, 128, 8
        $region36: #{tpu_custom_call.1} parent=31 // pred_fallthru
          _
      $region32: #{tpu_custom_call.1} parent=5 // pred_fallthru
        _
      %p397 = scmp.le.s32.totalorder 2, %s12
      // Predicated region
      $region37: #{tpu_custom_call.1} parent=5 // pred_check
        %p398 = pneg %p397
      $region38: #{tpu_custom_call.1} parent=5 // pred_check_branch
        %400 = sbr.rel (%p398) target = $region40
      $region39: #{tpu_custom_call.1} parent=5 // pred_region
        %s401 = ssub.s32 %s12, 2
        // Predicated region
        $region41: #{tpu_custom_call.1} parent=39 // pred_check
          %p402 = pneg %p109
        $region42: #{tpu_custom_call.1} parent=39 // pred_check_branch
          %404 = sbr.rel (%p402) target = $region44
        $region43: #{tpu_custom_call.1} parent=39 // pred_region
          %s405 = sand.u32 %s94, 1
          %s406 = scalar_lea.sflag [#allocation3], %s405
          %s407 = sand.u32 %s94, 1
          %s408 = smul.addr %s407, 16
          %s409 = scalar_lea.vmem [#allocation2], %s408
          %410 = dma.done %s406, 256
        $region44: #{tpu_custom_call.1} parent=39 // pred_fallthru
          _
      $region40: #{tpu_custom_call.1} parent=5 // pred_fallthru
        _
    $region6: #{tpu_custom_call.1} parent=1 // loop_footer
      %s16 = sadd.s32 1, %s12
    $region7: #{tpu_custom_call.1} parent=1 // loop_footer_branch
      %11 = sbr.rel target = $region3
    $region8: #{tpu_custom_call.1} parent=1 // loop_exit
      _
    %411 = vsyncpa [#allocation3], 1
    %s412 = scalar_lea.sflag [#allocation3], 1
    %413 = vsyncpa %s412, 1

</llo_original>
